<compile_context>
chip_gen: v6e
topology: v6e:2x2x1
jax: 0.10.0
libtpu: 0.0.40
codegen_flags: <defaults>
</compile_context>

<pallas_src>
import jax
import jax.numpy as jnp
from jax.experimental import pallas as pl
from jax.experimental.pallas import tpu as pltpu

_MIB = 1024 * 1024


# --------------------------------------------------------------------- hardware query


def _tpu_generation():
    """Best-effort (vmem_capacity_bytes, tensorcores_per_chip); conservative fallback."""
    vmem_bytes = 64 * _MIB          # conservative: v7x has the smallest VMEM (64 MiB)
    num_tc = 1                      # v5e / v6e: one TensorCore per chip
    try:
        info = pltpu.get_tpu_info()
        vmem_bytes = int(getattr(info, "vmem_capacity_bytes", vmem_bytes))
    except Exception:
        pass
    vmem_bytes = max(vmem_bytes, 32 * _MIB)
    try:
        kind = jax.devices()[0].device_kind.lower()
        if "v7" in kind:
            num_tc = 2
    except Exception:
        pass
    return vmem_bytes, num_tc


def _channel_block(cout, num_tc):
    # Single-TC chips: splitting Cout only adds ~0.35us/step overhead and shrinks MXU
    # M-occupancy -> use one block.  2-TC chips (v7x): exactly two Cout/2 blocks so the
    # "parallel" axis shards across cores; keep a floor of 32 channels per block.
    if num_tc >= 2 and cout % 16 == 0 and cout // 2 >= 32:
        return cout // 2
    return cout


# ---------------------------------------------------------------------- VMEM budgeting


def _fused_vmem_need(K, c_blk, nhw, out_isz):
    # patches single-buffered; weights/params/output double-buffered;
    # ~3 live f32 (c_blk, nhw) slabs in the epilogue (acc, centered, y).
    return (K * nhw * 2 + 2 * c_blk * K * 2 + 2 * c_blk * 3 * 4
            + 2 * c_blk * nhw * out_isz + 3 * c_blk * nhw * 4)


def _tiled_vmem_need(K, c_blk, t):
    # conv+stats kernel dominates: patches & raw f32 output double-buffered,
    # plus ~2 live f32 (c_blk, t) slabs (acc, acc*acc).
    return 2 * K * t * 2 + 2 * c_blk * K * 2 + 2 * c_blk * t * 4 + 2 * c_blk * t * 4


def _pick_nhw_tile(K, c_blk, nhw, budget, out_isz, forced=None):
    """Return the NHW tile size; == nhw means the fused single-kernel path."""
    if forced is not None:
        if forced < nhw and forced % 128 == 0 and nhw % forced == 0:
            return forced
        return nhw                                   # cannot honor -> fused fallback
    if _fused_vmem_need(K, c_blk, nhw, out_isz) <= budget:
        return nhw
    if nhw % 128 != 0:
        return nhw                                   # fused fallback (full-dim blocks)
    best = None
    t = 128
    while t < nhw:
        if nhw % t == 0 and _tiled_vmem_need(K, c_blk, t) <= budget:
            best = t
        t += 128
    return best if best is not None else 128


# -------------------------------------------------------------------------- kernels


def _make_fused_kernel(nhw, eps, linear):
    inv_n = 1.0 / float(nhw)

    def kernel(p_ref, w_ref, par_ref, o_ref):
        # (c_blk, K) @ (K, NHW) -> (c_blk, NHW): bf16 MXU operands, f32 accumulation.
        acc = jnp.dot(w_ref[...], p_ref[...], preferred_element_type=jnp.float32)
        # BatchNorm2d training-mode batch stats; two-pass (cancellation-safe) variance.
        mean = jnp.sum(acc, axis=1, keepdims=True) * inv_n            # (c_blk, 1)
        centered = acc - mean
        var = jnp.sum(centered * centered, axis=1, keepdims=True) * inv_n
        scale = par_ref[:, 0:1] * jax.lax.rsqrt(var + eps)            # gamma
        y = centered * scale + par_ref[:, 1:2]                        # + beta
        if not linear:
            y = jnp.where(y >= 0.0, y, y * par_ref[:, 2:3])           # PReLU(alpha)
        # linear=True: identity after BN.
        o_ref[...] = y.astype(o_ref.dtype)                            # lane-dense store

    return kernel


def _conv_stats_kernel(p_ref, w_ref, o_ref, s1_ref, s2_ref):
    # Tiled-NHW pass 1: conv tile + per-channel sum / sum-of-squares accumulated across
    # the "arbitrary" NHW grid axis so BN uses full-batch (not per-tile) statistics.
    acc = jnp.dot(w_ref[...], p_ref[...], preferred_element_type=jnp.float32)
    o_ref[...] = acc                                                  # raw conv (f32)

    @pl.when(pl.program_id(1) == 0)
    def _():
        s1_ref[...] = jnp.zeros_like(s1_ref)
        s2_ref[...] = jnp.zeros_like(s2_ref)

    s1_ref[...] += jnp.sum(acc, axis=1, keepdims=True)
    s2_ref[...] += jnp.sum(acc * acc, axis=1, keepdims=True)


def _make_bn_act_kernel(nhw, eps, linear):
    inv_n = 1.0 / float(nhw)

    def kernel(x_ref, s1_ref, s2_ref, par_ref, o_ref):
        mean = s1_ref[...] * inv_n
        var = jnp.maximum(s2_ref[...] * inv_n - mean * mean, 0.0)
        scale = par_ref[:, 0:1] * jax.lax.rsqrt(var + eps)
        shift = par_ref[:, 1:2] - mean * scale
        y = x_ref[...] * scale + shift
        if not linear:
            y = jnp.where(y >= 0.0, y, y * par_ref[:, 2:3])
        o_ref[...] = y.astype(o_ref.dtype)

    return kernel


# --------------------------------------------------------------------------- wrapper


def _im2col(x_nchw, KH, KW, stride, padding):
    """Build the (Cin*KH*KW, N*Ho*Wo) im2col operand (pad folded into the gather)."""
    N, Cin, H, W = x_nchw.shape
    Ho = (H + 2 * padding - KH) // stride + 1
    Wo = (W + 2 * padding - KW) // stride + 1
    xp = jnp.pad(jnp.transpose(x_nchw, (1, 0, 2, 3)),
                 ((0, 0), (0, 0), (padding, padding), (padding, padding)))
    rows = []
    for kh in range(KH):
        cols = []
        for kw in range(KW):
            cols.append(xp[:, :, kh:kh + (Ho - 1) * stride + 1:stride,
                               kw:kw + (Wo - 1) * stride + 1:stride])  # (Cin, N, Ho, Wo)
        rows.append(jnp.stack(cols, axis=1))                            # (Cin, KW, N, Ho, Wo)
    pat = jnp.stack(rows, axis=1)                                       # (Cin, KH, KW, N, Ho, Wo)
    # Flat order cin*KH*KW + kh*KW + kw == weight.reshape(Cout, -1) order.
    return pat.reshape(Cin * KH * KW, N * Ho * Wo), Ho, Wo


def conv_block_forward(x_nchw, weight_oihw, gamma, beta, alpha=None, *,
                       stride=1, padding=1, eps=1e-5, linear=False,
                       out_dtype=jnp.float32, nhw_tile=None):
    """ConvBlock forward (PyTorch NCHW / OIHW I/O).

    BatchNorm uses batch statistics (training mode, biased variance), matching a
    freshly constructed nn.BatchNorm2d called in training mode.
    """
    N, Cin, H, W = x_nchw.shape
    Cout, Cin_w, KH, KW = weight_oihw.shape
    assert Cin_w == Cin, "grouped / depthwise conv not supported here"
    if not linear and alpha is None:
        raise ValueError("linear=False requires per-channel PReLU alpha")

    # im2col built directly in bf16 (MXU operand dtype) -> half the HBM intermediate.
    patches, Ho, Wo = _im2col(x_nchw.astype(jnp.bfloat16), KH, KW, stride, padding)
    K = Cin * KH * KW
    NHW = N * Ho * Wo

    w_bf = weight_oihw.reshape(Cout, K).astype(jnp.bfloat16)           # (Cout, K)
    alpha_col = (jnp.ones((Cout,), jnp.float32) if linear
                 else alpha.astype(jnp.float32).reshape(Cout))
    params = jnp.stack([gamma.astype(jnp.float32).reshape(Cout),
                        beta.astype(jnp.float32).reshape(Cout),
                        alpha_col], axis=1)                             # (Cout, 3)

    vmem_bytes, num_tc = _tpu_generation()
    budget = int(vmem_bytes * 0.6)           # generation-aware working-set budget
    vmem_limit = int(vmem_bytes * 0.75)      # ~96 MiB on v5e/v6e, ~48 MiB on v7x
    c_blk = _channel_block(Cout, num_tc)
    n_cblk = Cout // c_blk
    out_isz = jnp.dtype(out_dtype).itemsize
    t_nhw = _pick_nhw_tile(K, c_blk, NHW, budget, out_isz, forced=nhw_tile)

    if t_nhw >= NHW:
        # ------- fused single-kernel path: each step sees all of NHW (exact BN) -------
        kernel = _make_fused_kernel(NHW, eps, linear)
        cost = pl.CostEstimate(
            flops=2 * Cout * K * NHW + 6 * Cout * NHW,
            transcendentals=Cout,
            bytes_accessed=K * NHW * 2 + Cout * K * 2 + Cout * 3 * 4
                           + Cout * NHW * out_isz)

        def run_fused(single_buffer_patches):
            if single_buffer_patches:
                patches_spec = pl.BlockSpec((K, NHW), lambda g: (0, 0),
                                            pipeline_mode=pl.Buffered(1))
            else:
                patches_spec = pl.BlockSpec((K, NHW), lambda g: (0, 0))
            return pl.pallas_call(
                kernel,
                out_shape=jax.ShapeDtypeStruct((Cout, NHW), out_dtype),
                grid=(n_cblk,),
                in_specs=[
                    patches_spec,                                      # shared im2col
                    pl.BlockSpec((c_blk, K), lambda g: (g, 0)),        # weights
                    pl.BlockSpec((c_blk, 3), lambda g: (g, 0)),        # gamma|beta|alpha
                ],
                out_specs=pl.BlockSpec((c_blk, NHW), lambda g: (g, 0)),
                compiler_params=pltpu.CompilerParams(
                    dimension_semantics=("parallel",),
                    vmem_limit_bytes=vmem_limit),
                cost_estimate=cost,
            )(patches, w_bf, params)

        try:
            out_cp = run_fused(True)
        except Exception:
            # Fallback if this JAX build rejects single-buffering of the constant block.
            out_cp = run_fused(False)
    else:
        # ------- tiled-NHW path: conv+stats pass, then BN/PReLU normalize pass -------
        n_tiles = NHW // t_nhw
        conv_raw, s1, s2 = pl.pallas_call(
            _conv_stats_kernel,
            out_shape=(jax.ShapeDtypeStruct((Cout, NHW), jnp.float32),
                       jax.ShapeDtypeStruct((Cout, 1), jnp.float32),
                       jax.ShapeDtypeStruct((Cout, 1), jnp.float32)),
            grid=(n_cblk, n_tiles),
            in_specs=[
                pl.BlockSpec((K, t_nhw), lambda g, t: (0, t)),         # im2col tile
                pl.BlockSpec((c_blk, K), lambda g, t: (g, 0)),         # weights
            ],
            out_specs=(
                pl.BlockSpec((c_blk, t_nhw), lambda g, t: (g, t)),     # raw conv (f32)
                pl.BlockSpec((c_blk, 1), lambda g, t: (g, 0)),         # sum accumulator
                pl.BlockSpec((c_blk, 1), lambda g, t: (g, 0)),         # sumsq accumulator
            ),
            compiler_params=pltpu.CompilerParams(
                dimension_semantics=("parallel", "arbitrary"),
                vmem_limit_bytes=vmem_limit),
            cost_estimate=pl.CostEstimate(
                flops=2 * Cout * K * NHW + 4 * Cout * NHW,
                transcendentals=0,
                bytes_accessed=K * NHW * 2 + Cout * K * 2 + Cout * NHW * 4),
        )(patches, w_bf)

        out_cp = pl.pallas_call(
            _make_bn_act_kernel(NHW, eps, linear),
            out_shape=jax.ShapeDtypeStruct((Cout, NHW), out_dtype),
            grid=(n_cblk, n_tiles),
            in_specs=[
                pl.BlockSpec((c_blk, t_nhw), lambda g, t: (g, t)),
                pl.BlockSpec((c_blk, 1), lambda g, t: (g, 0)),
                pl.BlockSpec((c_blk, 1), lambda g, t: (g, 0)),
                pl.BlockSpec((c_blk, 3), lambda g, t: (g, 0)),
            ],
            out_specs=pl.BlockSpec((c_blk, t_nhw), lambda g, t: (g, t)),
            compiler_params=pltpu.CompilerParams(
                dimension_semantics=("parallel", "parallel"),
                vmem_limit_bytes=vmem_limit),
            cost_estimate=pl.CostEstimate(
                flops=4 * Cout * NHW,
                transcendentals=Cout,
                bytes_accessed=Cout * NHW * 4 + Cout * NHW * out_isz),
        )(conv_raw, s1, s2, params)

    # (Cout, N*Ho*Wo) -> (N, Cout, Ho, Wo)
    return jnp.transpose(out_cp.reshape(Cout, N, Ho, Wo), (1, 0, 2, 3))


# --------------------------------------------------------------------------- reference


def conv_block_reference(x_nchw, weight_oihw, gamma, beta, alpha=None, *,
                         stride=1, padding=1, eps=1e-5, linear=False):
    """Plain-JAX reference using the same bf16-operand / f32-accumulate math."""
    N = x_nchw.shape[0]
    Cout, _, KH, KW = weight_oihw.shape
    patches, Ho, Wo = _im2col(x_nchw.astype(jnp.bfloat16), KH, KW, stride, padding)
    K = patches.shape[0]
    acc = jnp.dot(weight_oihw.reshape(Cout, K).astype(jnp.bfloat16), patches,
                  preferred_element_type=jnp.float32)
    mean = jnp.mean(acc, axis=1, keepdims=True)
    var = jnp.mean((acc - mean) ** 2, axis=1, keepdims=True)
    y = (acc - mean) * jax.lax.rsqrt(var + eps) * gamma.reshape(Cout, 1) \
        + beta.reshape(Cout, 1)
    if not linear:
        y = jnp.where(y >= 0.0, y, y * alpha.reshape(Cout, 1))
    return jnp.transpose(y.reshape(Cout, N, Ho, Wo), (1, 0, 2, 3))


# -------------------------------------------------------------------------------- main


if __name__ == "__main__":
    key = jax.random.PRNGKey(0)
    k1, k2, k3, k4, k5 = jax.random.split(key, 5)

    # --- ConvBlock(4, 64, 3, 2, 1): the module's replaced mobilefacenet.conv1 ---
    N, Cin, H, W = 2, 4, 16, 16
    Cout, Kk, S, P = 64, 3, 2, 1

    x = jax.random.normal(k1, (N, Cin, H, W), jnp.float32)
    # Conv2d init in MobileFaceNet: normal(0, sqrt(2/(k*k*oup))).
    weight = jax.random.normal(k2, (Cout, Cin, Kk, Kk), jnp.float32) * jnp.sqrt(
        2.0 / (Kk * Kk * Cout))
    gamma = jnp.ones((Cout,), jnp.float32)          # BatchNorm2d weight init
    beta = jnp.zeros((Cout,), jnp.float32)          # BatchNorm2d bias init
    alpha = jnp.full((Cout,), 0.25, jnp.float32)    # PReLU default init

    out = conv_block_forward(x, weight, gamma, beta, alpha, stride=S, padding=P)
    out = jax.block_until_ready(out)
    assert out.shape == (N, Cout, 8, 8), out.shape
    ref = conv_block_reference(x, weight, gamma, beta, alpha, stride=S, padding=P)
    assert bool(jnp.all(jnp.isfinite(out)))
    assert bool(jnp.allclose(out, ref, atol=2e-3, rtol=2e-3))

    # --- linear=True path (e.g. ConvBlock(..., 1, 1, 0, linear=True)): identity after BN ---
    Cin2, Cout2 = 8, 16
    x2 = jax.random.normal(k3, (N, Cin2, H, W), jnp.float32)
    w2 = jax.random.normal(k4, (Cout2, Cin2, 1, 1), jnp.float32) * jnp.sqrt(2.0 / Cout2)
    g2 = jnp.ones((Cout2,), jnp.float32)
    b2 = jnp.zeros((Cout2,), jnp.float32)

    out2 = conv_block_forward(x2, w2, g2, b2, None, stride=1, padding=0, linear=True)
    out2 = jax.block_until_ready(out2)
    ref2 = conv_block_reference(x2, w2, g2, b2, None, stride=1, padding=0, linear=True)
    assert out2.shape == (N, Cout2, H, W), out2.shape
    assert bool(jnp.allclose(out2, ref2, atol=2e-3, rtol=2e-3))
    assert bool(jnp.any(out2 < 0))   # linear path preserves negatives (no PReLU/ReLU)

    # --- tiled-NHW path (forced 128-wide tiles): BN stats stay full-batch across tiles ---
    H3 = W3 = 32                     # Ho=Wo=16 -> NHW = 2*16*16 = 512, 4 tiles of 128
    x3 = jax.random.normal(k5, (N, Cin, H3, W3), jnp.float32)
    out3 = conv_block_forward(x3, weight, gamma, beta, alpha, stride=S, padding=P,
                              nhw_tile=128)
    out3 = jax.block_until_ready(out3)
    ref3 = conv_block_reference(x3, weight, gamma, beta, alpha, stride=S, padding=P)
    assert out3.shape == (N, Cout, 16, 16), out3.shape
    assert bool(jnp.allclose(out3, ref3, atol=2e-3, rtol=2e-3))

    print("KERNEL_OK")
</pallas_src>

<mosaic_0001>
module attributes {stable_mosaic.version = 11 : i64} {
  func.func @kernel(%arg0: i32, %arg1: memref<36x128xbf16, #tpu.memory_space<vmem>>, %arg2: memref<64x36xbf16, #tpu.memory_space<vmem>>, %arg3: memref<64x3xf32, #tpu.memory_space<vmem>>, %arg4: memref<64x128xf32, #tpu.memory_space<vmem>>) attributes {dimension_semantics = [#tpu.dimension_semantics<parallel>], iteration_bounds = array<i64: 1>, scalar_prefetch = 0 : i64, scratch_operands = 0 : i64, tpu.core_type = #tpu.core_type<tc>, window_params = [{pipeline_mode = #tpu.pipeline_mode<synchronous>, transform_indices = @transform_0, window_bounds = array<i64: 36, 128>}, {transform_indices = @transform_1, window_bounds = array<i64: 64, 36>}, {transform_indices = @transform_2, window_bounds = array<i64: 64, 3>}, {transform_indices = @transform_3, window_bounds = array<i64: 64, 128>}]} {
    %c0 = arith.constant 0 : index
    %c0_0 = arith.constant 0 : index
    %0 = vector.load %arg2[%c0, %c0_0] : memref<64x36xbf16, #tpu.memory_space<vmem>>, vector<64x36xbf16>
    %c0_1 = arith.constant 0 : index
    %c0_2 = arith.constant 0 : index
    %1 = vector.load %arg1[%c0_1, %c0_2] : memref<36x128xbf16, #tpu.memory_space<vmem>>, vector<36x128xbf16>
    %cst = arith.constant dense<0.000000e+00> : vector<64x128xf32>
    %2 = tpu.matmul %0, %1, %cst {dimension_numbers = #tpu.dot_dimension_numbers<[1], [0], [0], [1], [0, 0, 1, 1], [], []>} : vector<64x36xbf16>, vector<36x128xbf16>, vector<64x128xf32> -> vector<64x128xf32>
    %cst_3 = arith.constant dense<0.000000e+00> : vector<64xf32>
    %3 = vector.multi_reduction <add>, %2, %cst_3 [1] : vector<64x128xf32> to vector<64xf32>
    %4 = vector.shape_cast %3 : vector<64xf32> to vector<64x1xf32>
    %cst_4 = arith.constant 7.812500e-03 : f32
    %5 = vector.broadcast %cst_4 : f32 to vector<64x1xf32>
    %6 = arith.mulf %4, %5 : vector<64x1xf32>
    %7 = vector.broadcast %6 : vector<64x1xf32> to vector<64x128xf32>
    %8 = arith.subf %2, %7 : vector<64x128xf32>
    %9 = arith.mulf %8, %8 : vector<64x128xf32>
    %cst_5 = arith.constant dense<0.000000e+00> : vector<64xf32>
    %10 = vector.multi_reduction <add>, %9, %cst_5 [1] : vector<64x128xf32> to vector<64xf32>
    %11 = vector.shape_cast %10 : vector<64xf32> to vector<64x1xf32>
    %cst_6 = arith.constant 7.812500e-03 : f32
    %12 = vector.broadcast %cst_6 : f32 to vector<64x1xf32>
    %13 = arith.mulf %11, %12 : vector<64x1xf32>
    %c0_7 = arith.constant 0 : index
    %c0_8 = arith.constant 0 : index
    %14 = vector.load %arg3[%c0_7, %c0_8] : memref<64x3xf32, #tpu.memory_space<vmem>>, vector<64x1xf32>
    %cst_9 = arith.constant 9.99999974E-6 : f32
    %15 = vector.broadcast %cst_9 : f32 to vector<64x1xf32>
    %16 = arith.addf %13, %15 : vector<64x1xf32>
    %17 = math.rsqrt %16 : vector<64x1xf32>
    %18 = arith.mulf %14, %17 : vector<64x1xf32>
    %19 = vector.broadcast %18 : vector<64x1xf32> to vector<64x128xf32>
    %20 = arith.mulf %8, %19 : vector<64x128xf32>
    %c0_10 = arith.constant 0 : index
    %c1 = arith.constant 1 : index
    %21 = vector.load %arg3[%c0_10, %c1] : memref<64x3xf32, #tpu.memory_space<vmem>>, vector<64x1xf32>
    %22 = vector.broadcast %21 : vector<64x1xf32> to vector<64x128xf32>
    %23 = arith.addf %20, %22 : vector<64x128xf32>
    %cst_11 = arith.constant 0.000000e+00 : f32
    %24 = vector.broadcast %cst_11 : f32 to vector<64x128xf32>
    %25 = arith.cmpf oge, %23, %24 : vector<64x128xf32>
    %c0_12 = arith.constant 0 : index
    %c2 = arith.constant 2 : index
    %26 = vector.load %arg3[%c0_12, %c2] : memref<64x3xf32, #tpu.memory_space<vmem>>, vector<64x1xf32>
    %27 = vector.broadcast %26 : vector<64x1xf32> to vector<64x128xf32>
    %28 = arith.mulf %23, %27 : vector<64x128xf32>
    %29 = arith.select %25, %23, %28 : vector<64x128xi1>, vector<64x128xf32>
    %c0_13 = arith.constant 0 : index
    %c0_14 = arith.constant 0 : index
    %30 = vector.load %arg4[%c0_13, %c0_14] : memref<64x128xf32, #tpu.memory_space<vmem>>, vector<64x128xf32>
    tpu.vector_store %arg4[%c0_13, %c0_14], %29 {strides = array<i32>} : memref<64x128xf32, #tpu.memory_space<vmem>>, vector<64x128xf32>,
    return
  }
  func.func @transform_0(%arg0: i32) -> (i32, i32) {
    %c0_i32 = arith.constant 0 : i32
    %c0_i32_0 = arith.constant 0 : i32
    %c0_i32_1 = arith.constant 0 : i32
    return %c0_i32, %c0_i32_0 : i32, i32
  }
  func.func @transform_1(%arg0: i32) -> (i32, i32) {
    %c0_i32 = arith.constant 0 : i32
    %c0_i32_0 = arith.constant 0 : i32
    return %arg0, %c0_i32 : i32, i32
  }
  func.func @transform_2(%arg0: i32) -> (i32, i32) {
    %c0_i32 = arith.constant 0 : i32
    %c0_i32_0 = arith.constant 0 : i32
    return %arg0, %c0_i32 : i32, i32
  }
  func.func @transform_3(%arg0: i32) -> (i32, i32) {
    %c0_i32 = arith.constant 0 : i32
    %c0_i32_0 = arith.constant 0 : i32
    return %arg0, %c0_i32 : i32, i32
  }
}

module attributes {stable_mosaic.version = 11 : i64} {
  func.func @kernel(%arg0: i32, %arg1: memref<36x128xbf16, #tpu.memory_space<vmem>>, %arg2: memref<64x36xbf16, #tpu.memory_space<vmem>>, %arg3: memref<64x3xf32, #tpu.memory_space<vmem>>, %arg4: memref<64x128xf32, #tpu.memory_space<vmem>>) attributes {dimension_semantics = [#tpu.dimension_semantics<parallel>], iteration_bounds = array<i64: 1>, scalar_prefetch = 0 : i64, scratch_operands = 0 : i64, tpu.core_type = #tpu.core_type<tc>, window_params = [{pipeline_mode = #tpu.pipeline_mode<synchronous>, transform_indices = @transform_0, window_bounds = array<i64: 36, 128>}, {transform_indices = @transform_1, window_bounds = array<i64: 64, 36>}, {transform_indices = @transform_2, window_bounds = array<i64: 64, 3>}, {transform_indices = @transform_3, window_bounds = array<i64: 64, 128>}]} {
    %c0 = arith.constant 0 : index
    %c0_0 = arith.constant 0 : index
    %0 = vector.load %arg2[%c0, %c0_0] : memref<64x36xbf16, #tpu.memory_space<vmem>>, vector<64x36xbf16>
    %c0_1 = arith.constant 0 : index
    %c0_2 = arith.constant 0 : index
    %1 = vector.load %arg1[%c0_1, %c0_2] : memref<36x128xbf16, #tpu.memory_space<vmem>>, vector<36x128xbf16>
    %cst = arith.constant dense<0.000000e+00> : vector<64x128xf32>
    %2 = tpu.matmul %0, %1, %cst {dimension_numbers = #tpu.dot_dimension_numbers<[1], [0], [0], [1], [0, 0, 1, 1], [], []>} : vector<64x36xbf16>, vector<36x128xbf16>, vector<64x128xf32> -> vector<64x128xf32>
    %cst_3 = arith.constant dense<0.000000e+00> : vector<64xf32>
    %3 = vector.multi_reduction <add>, %2, %cst_3 [1] : vector<64x128xf32> to vector<64xf32>
    %4 = vector.shape_cast %3 : vector<64xf32> to vector<64x1xf32>
    %cst_4 = arith.constant 7.812500e-03 : f32
    %5 = vector.broadcast %cst_4 : f32 to vector<64x1xf32>
    %6 = arith.mulf %4, %5 : vector<64x1xf32>
    %7 = vector.broadcast %6 : vector<64x1xf32> to vector<64x128xf32>
    %8 = arith.subf %2, %7 : vector<64x128xf32>
    %9 = arith.mulf %8, %8 : vector<64x128xf32>
    %cst_5 = arith.constant dense<0.000000e+00> : vector<64xf32>
    %10 = vector.multi_reduction <add>, %9, %cst_5 [1] : vector<64x128xf32> to vector<64xf32>
    %11 = vector.shape_cast %10 : vector<64xf32> to vector<64x1xf32>
    %cst_6 = arith.constant 7.812500e-03 : f32
    %12 = vector.broadcast %cst_6 : f32 to vector<64x1xf32>
    %13 = arith.mulf %11, %12 : vector<64x1xf32>
    %c0_7 = arith.constant 0 : index
    %c0_8 = arith.constant 0 : index
    %14 = vector.load %arg3[%c0_7, %c0_8] : memref<64x3xf32, #tpu.memory_space<vmem>>, vector<64x1xf32>
    %cst_9 = arith.constant 9.99999974E-6 : f32
    %15 = vector.broadcast %cst_9 : f32 to vector<64x1xf32>
    %16 = arith.addf %13, %15 : vector<64x1xf32>
    %17 = math.rsqrt %16 : vector<64x1xf32>
    %18 = arith.mulf %14, %17 : vector<64x1xf32>
    %19 = vector.broadcast %18 : vector<64x1xf32> to vector<64x128xf32>
    %20 = arith.mulf %8, %19 : vector<64x128xf32>
    %c0_10 = arith.constant 0 : index
    %c1 = arith.constant 1 : index
    %21 = vector.load %arg3[%c0_10, %c1] : memref<64x3xf32, #tpu.memory_space<vmem>>, vector<64x1xf32>
    %22 = vector.broadcast %21 : vector<64x1xf32> to vector<64x128xf32>
    %23 = arith.addf %20, %22 : vector<64x128xf32>
    %cst_11 = arith.constant 0.000000e+00 : f32
    %24 = vector.broadcast %cst_11 : f32 to vector<64x128xf32>
    %25 = arith.cmpf oge, %23, %24 : vector<64x128xf32>
    %c0_12 = arith.constant 0 : index
    %c2 = arith.constant 2 : index
    %26 = vector.load %arg3[%c0_12, %c2] : memref<64x3xf32, #tpu.memory_space<vmem>>, vector<64x1xf32>
    %27 = vector.broadcast %26 : vector<64x1xf32> to vector<64x128xf32>
    %28 = arith.mulf %23, %27 : vector<64x128xf32>
    %29 = arith.select %25, %23, %28 : vector<64x128xi1>, vector<64x128xf32>
    %c0_13 = arith.constant 0 : index
    %c0_14 = arith.constant 0 : index
    %30 = vector.load %arg4[%c0_13, %c0_14] : memref<64x128xf32, #tpu.memory_space<vmem>>, vector<64x128xf32>
    tpu.vector_store %arg4[%c0_13, %c0_14], %29 {strides = array<i32>} : memref<64x128xf32, #tpu.memory_space<vmem>>, vector<64x128xf32>,
    return
  }
  func.func @transform_0(%arg0: i32) -> (i32, i32) {
    %c0_i32 = arith.constant 0 : i32
    %c0_i32_0 = arith.constant 0 : i32
    %c0_i32_1 = arith.constant 0 : i32
    return %c0_i32, %c0_i32_0 : i32, i32
  }
  func.func @transform_1(%arg0: i32) -> (i32, i32) {
    %c0_i32 = arith.constant 0 : i32
    %c0_i32_0 = arith.constant 0 : i32
    return %arg0, %c0_i32 : i32, i32
  }
  func.func @transform_2(%arg0: i32) -> (i32, i32) {
    %c0_i32 = arith.constant 0 : i32
    %c0_i32_0 = arith.constant 0 : i32
    return %arg0, %c0_i32 : i32, i32
  }
  func.func @transform_3(%arg0: i32) -> (i32, i32) {
    %c0_i32 = arith.constant 0 : i32
    %c0_i32_0 = arith.constant 0 : i32
    return %arg0, %c0_i32 : i32, i32
  }
}

</mosaic_0001>

<llo_original>
// kernel: tpu_custom_call.1
$region0: #{tpu_custom_call.1}
  #allocation0 [shape = 'u32[]', space=smem, size = 0x4, offset = 0x4, fixed_abs, tag = 'smem constant byte address 0x4 - core index']
  #allocation1 [shape = 'u32[144,128]{1,0:T(1,128)}', space=vmem, size = 0x12000, scoped, tag = 'internal scratch']
  %s0 = inlined_call_operand.vmem [shape: bf16[36,128], index: 0, kind: input, shape index: {}]
  %s1 = inlined_call_operand.vmem [shape: bf16[64,36], index: 1, kind: input, shape index: {}]
  %s2 = inlined_call_operand.vmem [shape: f32[64,3], index: 2, kind: input, shape index: {}]
  %s3 = inlined_call_operand.hbm [shape: f32[64,128], index: 3, kind: output, shape index: {}]
  %s4 = sld [smem:[#allocation0]]
  $region22: #{tpu_custom_call.1} parent=0
    _
  %s6 = ssub.s32 1, %s4
  %s7 = scalar_select 0, %s6, %s4
  $region1: #{tpu_custom_call.1} parent=0
    #allocation2 [shape = 'u8[32768]{0}', space=vmem, size = 0x8000, scoped, tag = 'output window, operand 0, single buffered']
    #allocation3 [shape = 's32[1]{0}', space=sflag, size = 0x4, scoped, tag = 'scoped memory for tpu_custom_call.1']
    %8 = vsyncpa [#allocation3], 0
    // Predicated region
    $region2: #{tpu_custom_call.1} parent=1 // pred_check
      _
    $region3: #{tpu_custom_call.1} parent=1 // pred_check_branch
      %10 = sbr.rel (0) target = $region5
    $region4: #{tpu_custom_call.1} parent=1 // pred_region
      _
    $region5: #{tpu_custom_call.1} parent=1 // pred_fallthru
      _
    // Predicated region
    $region6: #{tpu_custom_call.1} parent=1 // pred_check
      _
    $region7: #{tpu_custom_call.1} parent=1 // pred_check_branch
      %12 = sbr.rel (0) target = $region9
    $region8: #{tpu_custom_call.1} parent=1 // pred_region
      _
    $region9: #{tpu_custom_call.1} parent=1 // pred_fallthru
      _
    // Predicated region
    $region10: #{tpu_custom_call.1} parent=1 // pred_check
      _
    $region11: #{tpu_custom_call.1} parent=1 // pred_check_branch
      %14 = sbr.rel (0) target = $region13
    $region12: #{tpu_custom_call.1} parent=1 // pred_region
      _
    $region13: #{tpu_custom_call.1} parent=1 // pred_fallthru
      _
    %v16 = vld [vmem:[%s1] sm:$0xf]
    %v17 = vld [vmem:[%s1 + $0x4] sm:$0xf]
    %v18 = vld [vmem:[%s1 + $0x8] sm:$0xf]
    %v19 = vld [vmem:[%s1 + $0xc] sm:$0xf]
    %v20 = vld [vmem:[%s1 + $0x10] sm:$0xf]
    %v21 = vld [vmem:[%s1 + $0x14] sm:$0xf]
    %v22 = vld [vmem:[%s1 + $0x18] sm:$0xf]
    %v23 = vld [vmem:[%s1 + $0x1c] sm:$0xf]
    %v24 = vld [vmem:[%s0] sm:$0xf]
    %v25 = vld [vmem:[%s0 + $0x4] sm:$0xf]
    %v26 = vld [vmem:[%s0 + $0x8] sm:$0xf]
    %v27 = vld [vmem:[%s0 + $0xc] sm:$0xf]
    %v28 = vld [vmem:[%s0 + $0x10] sm:$0x3]
    %v37 = vunpack.c.l.b16 %v16
    %v38 = vunpack.c.l.b16 %v17
    %v39 = vunpack.c.l.b16 %v18
    %v40 = vunpack.c.l.b16 %v19
    %v41 = vunpack.c.l.b16 %v20
    %v42 = vunpack.c.l.b16 %v21
    %v43 = vunpack.c.l.b16 %v22
    %v44 = vunpack.c.l.b16 %v23
    %v45 = vpack.c.b16 %v38, %v37
    %v46 = vpack.c.b16 %v40, %v39
    %v47 = vpack.c.b16 %v42, %v41
    %v48 = vpack.c.b16 %v44, %v43
    %v54 = vunpack.c.l.b16 %v24
    %v55 = vunpack.c.l.b16 %v25
    %v56 = vunpack.c.l.b16 %v26
    %v57 = vunpack.c.l.b16 %v27
    %v58 = vunpack.c.l.b16 %v28
    %v59 = vpack.c.b16 %v55, %v54
    %v60 = vpack.c.b16 %v57, %v56
    %v61 = vpack.c.b16 %v58, %v58
    %vm64 = vcmask 293888
    %v66 = vsel %vm64, %v45, 0
    %v69 = vsel %vm64, %v46, 0
    %v72 = vsel %vm64, %v47, 0
    %v75 = vsel %vm64, %v48, 0
    %vm77 = vcmask 1041408
    %v79 = vsel %vm77, %v61, 0
    %81 = vmatprep.subr.bf16.mxu0 0
    %82 = vmatpush1.bf16.msra.mxu0 0
    %83 = vmatprep.subr.bf16.mxu0 0
    %84 = vmatpush1.bf16.msra.mxu0 0
    %85 = vmatprep.subr.bf16.mxu0 0
    %86 = vmatpush1.bf16.msra.mxu0 0
    %87 = vmatprep.subr.bf16.mxu0 0
    %88 = vmatpush1.bf16.msra.mxu0 0
    %89 = vmatprep.subr.bf16.mxu0 0
    %90 = vmatpush1.bf16.msra.mxu0 0
    %91 = vmatprep.subr.bf16.mxu0 0
    %92 = vmatpush1.bf16.msra.mxu0 %v79
    %93 = vmatprep.subr.bf16.mxu0 0
    %94 = vmatpush1.bf16.msra.mxu0 %v60
    %95 = vmatprep.subr.bf16.mxu0 0
    %96 = vmatpush1.bf16.msra.mxu0 %v59
    %97 = vmatprep.subr.bf16.mxu0 0
    %98 = vmatpush2.bf16.msra.mxu0 0
    %99 = vmatprep.subr.bf16.mxu0 0
    %100 = vmatpush2.bf16.msra.mxu0 0
    %101 = vmatprep.subr.bf16.mxu0 0
    %102 = vmatpush2.bf16.msra.mxu0 0
    %103 = vmatprep.subr.bf16.mxu0 0
    %104 = vmatpush2.bf16.msra.mxu0 0
    %105 = vmatprep.subr.bf16.mxu0 0
    %106 = vmatpush2.bf16.msra.mxu0 0
    %107 = vmatprep.subr.bf16.mxu0 0
    %108 = vmatpush2.bf16.msra.mxu0 0
    %109 = vmatprep.subr.bf16.mxu0 0
    %110 = vmatpush2.bf16.msra.mxu0 0
    %111 = vmatprep.subr.bf16.mxu0 0
    %112 = vmatpush2.bf16.msra.mxu0 0
    %113 = vmatprep.mubr.bf16.mxu0 0
    %114 = vmatmul.mubr.bf16.gmra.mxu0 %v66
    %v115 = vpop.f32.mrf.mxu0
    %v116 = vadd.f32 0.0, %v115
    %v117 = vpop.f32.mrf.mxu0
    %v118 = vpop.f32.mrf.mxu0
    %v119 = vadd.f32 0.0, %v118
    %v120 = vpop.f32.mrf.mxu0
    %121 = vmatprep.mubr.bf16.mxu0 0
    %122 = vmatmul.mubr.bf16.gmra.mxu0 %v69
    %v123 = vpop.f32.mrf.mxu0
    %v124 = vadd.f32 0.0, %v123
    %v125 = vpop.f32.mrf.mxu0
    %v126 = vpop.f32.mrf.mxu0
    %v127 = vadd.f32 0.0, %v126
    %v128 = vpop.f32.mrf.mxu0
    %129 = vmatprep.mubr.bf16.mxu0 0
    %130 = vmatmul.mubr.bf16.gmra.mxu0 %v72
    %v131 = vpop.f32.mrf.mxu0
    %v132 = vadd.f32 0.0, %v131
    %v133 = vpop.f32.mrf.mxu0
    %v134 = vpop.f32.mrf.mxu0
    %v135 = vadd.f32 0.0, %v134
    %v136 = vpop.f32.mrf.mxu0
    %137 = vmatprep.mubr.bf16.mxu0 0
    %138 = vmatmul.mubr.bf16.gmra.mxu0 %v75
    %v139 = vpop.f32.mrf.mxu0
    %v140 = vadd.f32 0.0, %v139
    %v141 = vpop.f32.mrf.mxu0
    %v142 = vpop.f32.mrf.mxu0
    %v143 = vadd.f32 0.0, %v142
    %v144 = vpop.f32.mrf.mxu0
    %145 = vdwg.mxu0
    %146 = vadd.xlane.f32.xlu0 %v116
    %v147 = vpop.xlane.xlu0 %146
    %148 = vadd.xlane.f32.xlu0 %v119
    %v149 = vpop.xlane.xlu0 %148
    %150 = vadd.xlane.f32.xlu0 %v124
    %v151 = vpop.xlane.xlu0 %150
    %152 = vadd.xlane.f32.xlu0 %v127
    %v153 = vpop.xlane.xlu0 %152
    %154 = vadd.xlane.f32.xlu0 %v132
    %v155 = vpop.xlane.xlu0 %154
    %156 = vadd.xlane.f32.xlu0 %v135
    %v157 = vpop.xlane.xlu0 %156
    %158 = vadd.xlane.f32.xlu0 %v140
    %v159 = vpop.xlane.xlu0 %158
    %160 = vadd.xlane.f32.xlu0 %v143
    %v161 = vpop.xlane.xlu0 %160
    %v162 = vmul.f32 %v147, 0.0078125
    %v163 = vmul.f32 %v149, 0.0078125
    %v164 = vmul.f32 %v151, 0.0078125
    %v165 = vmul.f32 %v153, 0.0078125
    %v166 = vmul.f32 %v155, 0.0078125
    %v167 = vmul.f32 %v157, 0.0078125
    %v168 = vmul.f32 %v159, 0.0078125
    %v169 = vmul.f32 %v161, 0.0078125
    %v170 = vsub.f32 %v116, %v162
    %v171 = vsub.f32 %v119, %v163
    %v172 = vsub.f32 %v124, %v164
    %v173 = vsub.f32 %v127, %v165
    %v174 = vsub.f32 %v132, %v166
    %v175 = vsub.f32 %v135, %v167
    %v176 = vsub.f32 %v140, %v168
    %v177 = vsub.f32 %v143, %v169
    %v178 = vmul.f32 %v170, %v170
    %v179 = vmul.f32 %v171, %v171
    %v180 = vmul.f32 %v172, %v172
    %v181 = vmul.f32 %v173, %v173
    %v182 = vmul.f32 %v174, %v174
    %v183 = vmul.f32 %v175, %v175
    %v184 = vmul.f32 %v176, %v176
    %v185 = vmul.f32 %v177, %v177
    %186 = vadd.xlane.f32.xlu0 %v178
    %v187 = vpop.xlane.xlu0 %186
    %188 = vadd.xlane.f32.xlu0 %v179
    %v189 = vpop.xlane.xlu0 %188
    %190 = vadd.xlane.f32.xlu0 %v180
    %v191 = vpop.xlane.xlu0 %190
    %192 = vadd.xlane.f32.xlu0 %v181
    %v193 = vpop.xlane.xlu0 %192
    %194 = vadd.xlane.f32.xlu0 %v182
    %v195 = vpop.xlane.xlu0 %194
    %196 = vadd.xlane.f32.xlu0 %v183
    %v197 = vpop.xlane.xlu0 %196
    %198 = vadd.xlane.f32.xlu0 %v184
    %v199 = vpop.xlane.xlu0 %198
    %200 = vadd.xlane.f32.xlu0 %v185
    %v201 = vpop.xlane.xlu0 %200
    %v202 = vmul.f32 %v187, 0.0078125
    %v203 = vmul.f32 %v189, 0.0078125
    %v204 = vmul.f32 %v191, 0.0078125
    %v205 = vmul.f32 %v193, 0.0078125
    %v206 = vmul.f32 %v195, 0.0078125
    %v207 = vmul.f32 %v197, 0.0078125
    %v208 = vmul.f32 %v199, 0.0078125
    %v209 = vmul.f32 %v201, 0.0078125
    %v210 = vld [vmem:[%s2] sm:$0xff]
    %v211 = vld [vmem:[%s2 + $0x8] sm:$0xff]
    %v212 = vld [vmem:[%s2 + $0x10] sm:$0xff]
    %v213 = vld [vmem:[%s2 + $0x18] sm:$0xff]
    %v214 = vld [vmem:[%s2 + $0x20] sm:$0xff]
    %v215 = vld [vmem:[%s2 + $0x28] sm:$0xff]
    %v216 = vld [vmem:[%s2 + $0x30] sm:$0xff]
    %v217 = vld [vmem:[%s2 + $0x38] sm:$0xff]
    %v218 = vadd.f32 %v202, 1e-05
    %v219 = vadd.f32 %v203, 1e-05
    %v220 = vadd.f32 %v204, 1e-05
    %v221 = vadd.f32 %v205, 1e-05
    %v222 = vadd.f32 %v206, 1e-05
    %v223 = vadd.f32 %v207, 1e-05
    %v224 = vadd.f32 %v208, 1e-05
    %v225 = vadd.f32 %v209, 1e-05
    %v226 = vrsqrt.pop %v218
    %v227 = vrsqrt.pop %v219
    %v228 = vrsqrt.pop %v220
    %v229 = vrsqrt.pop %v221
    %v230 = vrsqrt.pop %v222
    %v231 = vrsqrt.pop %v223
    %v232 = vrsqrt.pop %v224
    %v233 = vrsqrt.pop %v225
    %v234 = vmul.f32 %v210, %v226
    %v235 = vmul.f32 %v211, %v227
    %v236 = vmul.f32 %v212, %v228
    %v237 = vmul.f32 %v213, %v229
    %v238 = vmul.f32 %v214, %v230
    %v239 = vmul.f32 %v215, %v231
    %v240 = vmul.f32 %v216, %v232
    %v241 = vmul.f32 %v217, %v233
    %243 = vset.pattern.permute.xlu0 0
    %244 = vperm.xlu0 %243, %v234
    %v245 = vpop.permute.xlu0 %244
    %248 = vset.pattern.permute.xlu0 0
    %249 = vperm.xlu0 %248, %v235
    %v250 = vpop.permute.xlu0 %249
    %253 = vset.pattern.permute.xlu0 0
    %254 = vperm.xlu0 %253, %v236
    %v255 = vpop.permute.xlu0 %254
    %258 = vset.pattern.permute.xlu0 0
    %259 = vperm.xlu0 %258, %v237
    %v260 = vpop.permute.xlu0 %259
    %263 = vset.pattern.permute.xlu0 0
    %264 = vperm.xlu0 %263, %v238
    %v265 = vpop.permute.xlu0 %264
    %268 = vset.pattern.permute.xlu0 0
    %269 = vperm.xlu0 %268, %v239
    %v270 = vpop.permute.xlu0 %269
    %273 = vset.pattern.permute.xlu0 0
    %274 = vperm.xlu0 %273, %v240
    %v275 = vpop.permute.xlu0 %274
    %278 = vset.pattern.permute.xlu0 0
    %279 = vperm.xlu0 %278, %v241
    %v280 = vpop.permute.xlu0 %279
    %v282 = vmul.f32 %v170, %v245
    %v283 = vmul.f32 %v171, %v250
    %v284 = vmul.f32 %v172, %v255
    %v285 = vmul.f32 %v173, %v260
    %v286 = vmul.f32 %v174, %v265
    %v287 = vmul.f32 %v175, %v270
    %v288 = vmul.f32 %v176, %v275
    %v289 = vmul.f32 %v177, %v280
    %291 = vset.pattern.permute.xlu0 1
    %292 = vperm.xlu0 %291, %v210
    %v293 = vpop.permute.xlu0 %292
    %296 = vset.pattern.permute.xlu0 1
    %297 = vperm.xlu0 %296, %v211
    %v298 = vpop.permute.xlu0 %297
    %301 = vset.pattern.permute.xlu0 1
    %302 = vperm.xlu0 %301, %v212
    %v303 = vpop.permute.xlu0 %302
    %306 = vset.pattern.permute.xlu0 1
    %307 = vperm.xlu0 %306, %v213
    %v308 = vpop.permute.xlu0 %307
    %311 = vset.pattern.permute.xlu0 1
    %312 = vperm.xlu0 %311, %v214
    %v313 = vpop.permute.xlu0 %312
    %316 = vset.pattern.permute.xlu0 1
    %317 = vperm.xlu0 %316, %v215
    %v318 = vpop.permute.xlu0 %317
    %321 = vset.pattern.permute.xlu0 1
    %322 = vperm.xlu0 %321, %v216
    %v323 = vpop.permute.xlu0 %322
    %326 = vset.pattern.permute.xlu0 1
    %327 = vperm.xlu0 %326, %v217
    %v328 = vpop.permute.xlu0 %327
    %v330 = vadd.f32 %v282, %v293
    %v331 = vadd.f32 %v283, %v298
    %v332 = vadd.f32 %v284, %v303
    %v333 = vadd.f32 %v285, %v308
    %v334 = vadd.f32 %v286, %v313
    %v335 = vadd.f32 %v287, %v318
    %v336 = vadd.f32 %v288, %v323
    %v337 = vadd.f32 %v289, %v328
    %vm338 = vcmp.ge.f32.partialorder %v330, 0.0
    %vm339 = vcmp.ge.f32.partialorder %v331, 0.0
    %vm340 = vcmp.ge.f32.partialorder %v332, 0.0
    %vm341 = vcmp.ge.f32.partialorder %v333, 0.0
    %vm342 = vcmp.ge.f32.partialorder %v334, 0.0
    %vm343 = vcmp.ge.f32.partialorder %v335, 0.0
    %vm344 = vcmp.ge.f32.partialorder %v336, 0.0
    %vm345 = vcmp.ge.f32.partialorder %v337, 0.0
    %346 = vset.pattern.permute.xlu0 2
    %347 = vperm.xlu0 %346, %v210
    %v348 = vpop.permute.xlu0 %347
    %350 = vset.pattern.permute.xlu0 2
    %351 = vperm.xlu0 %350, %v211
    %v352 = vpop.permute.xlu0 %351
    %354 = vset.pattern.permute.xlu0 2
    %355 = vperm.xlu0 %354, %v212
    %v356 = vpop.permute.xlu0 %355
    %358 = vset.pattern.permute.xlu0 2
    %359 = vperm.xlu0 %358, %v213
    %v360 = vpop.permute.xlu0 %359
    %362 = vset.pattern.permute.xlu0 2
    %363 = vperm.xlu0 %362, %v214
    %v364 = vpop.permute.xlu0 %363
    %366 = vset.pattern.permute.xlu0 2
    %367 = vperm.xlu0 %366, %v215
    %v368 = vpop.permute.xlu0 %367
    %370 = vset.pattern.permute.xlu0 2
    %371 = vperm.xlu0 %370, %v216
    %v372 = vpop.permute.xlu0 %371
    %374 = vset.pattern.permute.xlu0 2
    %375 = vperm.xlu0 %374, %v217
    %v376 = vpop.permute.xlu0 %375
    %v378 = vmul.f32 %v330, %v348
    %v379 = vmul.f32 %v331, %v352
    %v380 = vmul.f32 %v332, %v356
    %v381 = vmul.f32 %v333, %v360
    %v382 = vmul.f32 %v334, %v364
    %v383 = vmul.f32 %v335, %v368
    %v384 = vmul.f32 %v336, %v372
    %v385 = vmul.f32 %v337, %v376
    %v386 = vsel %vm338, %v330, %v378
    %v387 = vsel %vm339, %v331, %v379
    %v388 = vsel %vm340, %v332, %v380
    %v389 = vsel %vm341, %v333, %v381
    %v390 = vsel %vm342, %v334, %v382
    %v391 = vsel %vm343, %v335, %v383
    %v392 = vsel %vm344, %v336, %v384
    %v393 = vsel %vm345, %v337, %v385
    %394 = vst [vmem:[#allocation2] sm:$0xff] %v386
    %395 = vst [vmem:[#allocation2 + $0x8] sm:$0xff] %v387
    %396 = vst [vmem:[#allocation2 + $0x10] sm:$0xff] %v388
    %397 = vst [vmem:[#allocation2 + $0x18] sm:$0xff] %v389
    %398 = vst [vmem:[#allocation2 + $0x20] sm:$0xff] %v390
    %399 = vst [vmem:[#allocation2 + $0x28] sm:$0xff] %v391
    %400 = vst [vmem:[#allocation2 + $0x30] sm:$0xff] %v392
    %401 = vst [vmem:[#allocation2 + $0x38] sm:$0xff] %v393
    // Predicated region
    $region14: #{tpu_custom_call.1} parent=1 // pred_check
      _
    $region15: #{tpu_custom_call.1} parent=1 // pred_check_branch
      %403 = sbr.rel (0) target = $region17
    $region16: #{tpu_custom_call.1} parent=1 // pred_region
      %s405 = ssub.s32 1024, 1024
      %406 = vsyncadd [#allocation3], %s405
      %s407 = sshll.u32 [#allocation2], 4
      %s408 = int_to_ptr.vmem [resolvable:$true] %s407
      %413 = dma.vmem_to_hbm [thread:$0]  %s408, 1024, %s3, [#allocation3], 128, 128, 8
    $region17: #{tpu_custom_call.1} parent=1 // pred_fallthru
      _
    // Predicated region
    $region18: #{tpu_custom_call.1} parent=1 // pred_check
      _
    $region19: #{tpu_custom_call.1} parent=1 // pred_check_branch
      %415 = sbr.rel (0) target = $region21
    $region20: #{tpu_custom_call.1} parent=1 // pred_region
      %416 = dma.done [#allocation3], 1024
    $region21: #{tpu_custom_call.1} parent=1 // pred_fallthru
      _
    %417 = vsyncpa [#allocation3], 1

// kernel: tpu_custom_call.1
$region0: #{tpu_custom_call.1}
  #allocation0 [shape = 'u32[]', space=smem, size = 0x4, offset = 0x4, fixed_abs, tag = 'smem constant byte address 0x4 - core index']
  #allocation1 [shape = 'u32[144,128]{1,0:T(1,128)}', space=vmem, size = 0x12000, scoped, tag = 'internal scratch']
  %s0 = inlined_call_operand.vmem [shape: bf16[36,128], index: 0, kind: input, shape index: {}]
  %s1 = inlined_call_operand.vmem [shape: bf16[64,36], index: 1, kind: input, shape index: {}]
  %s2 = inlined_call_operand.vmem [shape: f32[64,3], index: 2, kind: input, shape index: {}]
  %s3 = inlined_call_operand.hbm [shape: f32[64,128], index: 3, kind: output, shape index: {}]
  %s4 = sld [smem:[#allocation0]]
  $region22: #{tpu_custom_call.1} parent=0
    _
  %s6 = ssub.s32 1, %s4
  %s7 = scalar_select 0, %s6, %s4
  $region1: #{tpu_custom_call.1} parent=0
    #allocation2 [shape = 'u8[32768]{0}', space=vmem, size = 0x8000, scoped, tag = 'output window, operand 0, single buffered']
    #allocation3 [shape = 's32[1]{0}', space=sflag, size = 0x4, scoped, tag = 'scoped memory for tpu_custom_call.1']
    %8 = vsyncpa [#allocation3], 0
    // Predicated region
    $region2: #{tpu_custom_call.1} parent=1 // pred_check
      _
    $region3: #{tpu_custom_call.1} parent=1 // pred_check_branch
      %10 = sbr.rel (0) target = $region5
    $region4: #{tpu_custom_call.1} parent=1 // pred_region
      _
    $region5: #{tpu_custom_call.1} parent=1 // pred_fallthru
      _
    // Predicated region
    $region6: #{tpu_custom_call.1} parent=1 // pred_check
      _
    $region7: #{tpu_custom_call.1} parent=1 // pred_check_branch
      %12 = sbr.rel (0) target = $region9
    $region8: #{tpu_custom_call.1} parent=1 // pred_region
      _
    $region9: #{tpu_custom_call.1} parent=1 // pred_fallthru
      _
    // Predicated region
    $region10: #{tpu_custom_call.1} parent=1 // pred_check
      _
    $region11: #{tpu_custom_call.1} parent=1 // pred_check_branch
      %14 = sbr.rel (0) target = $region13
    $region12: #{tpu_custom_call.1} parent=1 // pred_region
      _
    $region13: #{tpu_custom_call.1} parent=1 // pred_fallthru
      _
    %v16 = vld [vmem:[%s1] sm:$0xf]
    %v17 = vld [vmem:[%s1 + $0x4] sm:$0xf]
    %v18 = vld [vmem:[%s1 + $0x8] sm:$0xf]
    %v19 = vld [vmem:[%s1 + $0xc] sm:$0xf]
    %v20 = vld [vmem:[%s1 + $0x10] sm:$0xf]
    %v21 = vld [vmem:[%s1 + $0x14] sm:$0xf]
    %v22 = vld [vmem:[%s1 + $0x18] sm:$0xf]
    %v23 = vld [vmem:[%s1 + $0x1c] sm:$0xf]
    %v24 = vld [vmem:[%s0] sm:$0xf]
    %v25 = vld [vmem:[%s0 + $0x4] sm:$0xf]
    %v26 = vld [vmem:[%s0 + $0x8] sm:$0xf]
    %v27 = vld [vmem:[%s0 + $0xc] sm:$0xf]
    %v28 = vld [vmem:[%s0 + $0x10] sm:$0x3]
    %v37 = vunpack.c.l.b16 %v16
    %v38 = vunpack.c.l.b16 %v17
    %v39 = vunpack.c.l.b16 %v18
    %v40 = vunpack.c.l.b16 %v19
    %v41 = vunpack.c.l.b16 %v20
    %v42 = vunpack.c.l.b16 %v21
    %v43 = vunpack.c.l.b16 %v22
    %v44 = vunpack.c.l.b16 %v23
    %v45 = vpack.c.b16 %v38, %v37
    %v46 = vpack.c.b16 %v40, %v39
    %v47 = vpack.c.b16 %v42, %v41
    %v48 = vpack.c.b16 %v44, %v43
    %v54 = vunpack.c.l.b16 %v24
    %v55 = vunpack.c.l.b16 %v25
    %v56 = vunpack.c.l.b16 %v26
    %v57 = vunpack.c.l.b16 %v27
    %v58 = vunpack.c.l.b16 %v28
    %v59 = vpack.c.b16 %v55, %v54
    %v60 = vpack.c.b16 %v57, %v56
    %v61 = vpack.c.b16 %v58, %v58
    %vm64 = vcmask 293888
    %v66 = vsel %vm64, %v45, 0
    %v69 = vsel %vm64, %v46, 0
    %v72 = vsel %vm64, %v47, 0
    %v75 = vsel %vm64, %v48, 0
    %vm77 = vcmask 1041408
    %v79 = vsel %vm77, %v61, 0
    %81 = vmatprep.subr.bf16.mxu0 0
    %82 = vmatpush1.bf16.msra.mxu0 0
    %83 = vmatprep.subr.bf16.mxu0 0
    %84 = vmatpush1.bf16.msra.mxu0 0
    %85 = vmatprep.subr.bf16.mxu0 0
    %86 = vmatpush1.bf16.msra.mxu0 0
    %87 = vmatprep.subr.bf16.mxu0 0
    %88 = vmatpush1.bf16.msra.mxu0 0
    %89 = vmatprep.subr.bf16.mxu0 0
    %90 = vmatpush1.bf16.msra.mxu0 0
    %91 = vmatprep.subr.bf16.mxu0 0
    %92 = vmatpush1.bf16.msra.mxu0 %v79
    %93 = vmatprep.subr.bf16.mxu0 0
    %94 = vmatpush1.bf16.msra.mxu0 %v60
    %95 = vmatprep.subr.bf16.mxu0 0
    %96 = vmatpush1.bf16.msra.mxu0 %v59
    %97 = vmatprep.subr.bf16.mxu0 0
    %98 = vmatpush2.bf16.msra.mxu0 0
    %99 = vmatprep.subr.bf16.mxu0 0
    %100 = vmatpush2.bf16.msra.mxu0 0
    %101 = vmatprep.subr.bf16.mxu0 0
    %102 = vmatpush2.bf16.msra.mxu0 0
    %103 = vmatprep.subr.bf16.mxu0 0
    %104 = vmatpush2.bf16.msra.mxu0 0
    %105 = vmatprep.subr.bf16.mxu0 0
    %106 = vmatpush2.bf16.msra.mxu0 0
    %107 = vmatprep.subr.bf16.mxu0 0
    %108 = vmatpush2.bf16.msra.mxu0 0
    %109 = vmatprep.subr.bf16.mxu0 0
    %110 = vmatpush2.bf16.msra.mxu0 0
    %111 = vmatprep.subr.bf16.mxu0 0
    %112 = vmatpush2.bf16.msra.mxu0 0
    %113 = vmatprep.mubr.bf16.mxu0 0
    %114 = vmatmul.mubr.bf16.gmra.mxu0 %v66
    %v115 = vpop.f32.mrf.mxu0
    %v116 = vadd.f32 0.0, %v115
    %v117 = vpop.f32.mrf.mxu0
    %v118 = vpop.f32.mrf.mxu0
    %v119 = vadd.f32 0.0, %v118
    %v120 = vpop.f32.mrf.mxu0
    %121 = vmatprep.mubr.bf16.mxu0 0
    %122 = vmatmul.mubr.bf16.gmra.mxu0 %v69
    %v123 = vpop.f32.mrf.mxu0
    %v124 = vadd.f32 0.0, %v123
    %v125 = vpop.f32.mrf.mxu0
    %v126 = vpop.f32.mrf.mxu0
    %v127 = vadd.f32 0.0, %v126
    %v128 = vpop.f32.mrf.mxu0
    %129 = vmatprep.mubr.bf16.mxu0 0
    %130 = vmatmul.mubr.bf16.gmra.mxu0 %v72
    %v131 = vpop.f32.mrf.mxu0
    %v132 = vadd.f32 0.0, %v131
    %v133 = vpop.f32.mrf.mxu0
    %v134 = vpop.f32.mrf.mxu0
    %v135 = vadd.f32 0.0, %v134
    %v136 = vpop.f32.mrf.mxu0
    %137 = vmatprep.mubr.bf16.mxu0 0
    %138 = vmatmul.mubr.bf16.gmra.mxu0 %v75
    %v139 = vpop.f32.mrf.mxu0
    %v140 = vadd.f32 0.0, %v139
    %v141 = vpop.f32.mrf.mxu0
    %v142 = vpop.f32.mrf.mxu0
    %v143 = vadd.f32 0.0, %v142
    %v144 = vpop.f32.mrf.mxu0
    %145 = vdwg.mxu0
    %146 = vadd.xlane.f32.xlu0 %v116
    %v147 = vpop.xlane.xlu0 %146
    %148 = vadd.xlane.f32.xlu0 %v119
    %v149 = vpop.xlane.xlu0 %148
    %150 = vadd.xlane.f32.xlu0 %v124
    %v151 = vpop.xlane.xlu0 %150
    %152 = vadd.xlane.f32.xlu0 %v127
    %v153 = vpop.xlane.xlu0 %152
    %154 = vadd.xlane.f32.xlu0 %v132
    %v155 = vpop.xlane.xlu0 %154
    %156 = vadd.xlane.f32.xlu0 %v135
    %v157 = vpop.xlane.xlu0 %156
    %158 = vadd.xlane.f32.xlu0 %v140
    %v159 = vpop.xlane.xlu0 %158
    %160 = vadd.xlane.f32.xlu0 %v143
    %v161 = vpop.xlane.xlu0 %160
    %v162 = vmul.f32 %v147, 0.0078125
    %v163 = vmul.f32 %v149, 0.0078125
    %v164 = vmul.f32 %v151, 0.0078125
    %v165 = vmul.f32 %v153, 0.0078125
    %v166 = vmul.f32 %v155, 0.0078125
    %v167 = vmul.f32 %v157, 0.0078125
    %v168 = vmul.f32 %v159, 0.0078125
    %v169 = vmul.f32 %v161, 0.0078125
    %v170 = vsub.f32 %v116, %v162
    %v171 = vsub.f32 %v119, %v163
    %v172 = vsub.f32 %v124, %v164
    %v173 = vsub.f32 %v127, %v165
    %v174 = vsub.f32 %v132, %v166
    %v175 = vsub.f32 %v135, %v167
    %v176 = vsub.f32 %v140, %v168
    %v177 = vsub.f32 %v143, %v169
    %v178 = vmul.f32 %v170, %v170
    %v179 = vmul.f32 %v171, %v171
    %v180 = vmul.f32 %v172, %v172
    %v181 = vmul.f32 %v173, %v173
    %v182 = vmul.f32 %v174, %v174
    %v183 = vmul.f32 %v175, %v175
    %v184 = vmul.f32 %v176, %v176
    %v185 = vmul.f32 %v177, %v177
    %186 = vadd.xlane.f32.xlu0 %v178
    %v187 = vpop.xlane.xlu0 %186
    %188 = vadd.xlane.f32.xlu0 %v179
    %v189 = vpop.xlane.xlu0 %188
    %190 = vadd.xlane.f32.xlu0 %v180
    %v191 = vpop.xlane.xlu0 %190
    %192 = vadd.xlane.f32.xlu0 %v181
    %v193 = vpop.xlane.xlu0 %192
    %194 = vadd.xlane.f32.xlu0 %v182
    %v195 = vpop.xlane.xlu0 %194
    %196 = vadd.xlane.f32.xlu0 %v183
    %v197 = vpop.xlane.xlu0 %196
    %198 = vadd.xlane.f32.xlu0 %v184
    %v199 = vpop.xlane.xlu0 %198
    %200 = vadd.xlane.f32.xlu0 %v185
    %v201 = vpop.xlane.xlu0 %200
    %v202 = vmul.f32 %v187, 0.0078125
    %v203 = vmul.f32 %v189, 0.0078125
    %v204 = vmul.f32 %v191, 0.0078125
    %v205 = vmul.f32 %v193, 0.0078125
    %v206 = vmul.f32 %v195, 0.0078125
    %v207 = vmul.f32 %v197, 0.0078125
    %v208 = vmul.f32 %v199, 0.0078125
    %v209 = vmul.f32 %v201, 0.0078125
    %v210 = vld [vmem:[%s2] sm:$0xff]
    %v211 = vld [vmem:[%s2 + $0x8] sm:$0xff]
    %v212 = vld [vmem:[%s2 + $0x10] sm:$0xff]
    %v213 = vld [vmem:[%s2 + $0x18] sm:$0xff]
    %v214 = vld [vmem:[%s2 + $0x20] sm:$0xff]
    %v215 = vld [vmem:[%s2 + $0x28] sm:$0xff]
    %v216 = vld [vmem:[%s2 + $0x30] sm:$0xff]
    %v217 = vld [vmem:[%s2 + $0x38] sm:$0xff]
    %v218 = vadd.f32 %v202, 1e-05
    %v219 = vadd.f32 %v203, 1e-05
    %v220 = vadd.f32 %v204, 1e-05
    %v221 = vadd.f32 %v205, 1e-05
    %v222 = vadd.f32 %v206, 1e-05
    %v223 = vadd.f32 %v207, 1e-05
    %v224 = vadd.f32 %v208, 1e-05
    %v225 = vadd.f32 %v209, 1e-05
    %v226 = vrsqrt.pop %v218
    %v227 = vrsqrt.pop %v219
    %v228 = vrsqrt.pop %v220
    %v229 = vrsqrt.pop %v221
    %v230 = vrsqrt.pop %v222
    %v231 = vrsqrt.pop %v223
    %v232 = vrsqrt.pop %v224
    %v233 = vrsqrt.pop %v225
    %v234 = vmul.f32 %v210, %v226
    %v235 = vmul.f32 %v211, %v227
    %v236 = vmul.f32 %v212, %v228
    %v237 = vmul.f32 %v213, %v229
    %v238 = vmul.f32 %v214, %v230
    %v239 = vmul.f32 %v215, %v231
    %v240 = vmul.f32 %v216, %v232
    %v241 = vmul.f32 %v217, %v233
    %243 = vset.pattern.permute.xlu0 0
    %244 = vperm.xlu0 %243, %v234
    %v245 = vpop.permute.xlu0 %244
    %248 = vset.pattern.permute.xlu0 0
    %249 = vperm.xlu0 %248, %v235
    %v250 = vpop.permute.xlu0 %249
    %253 = vset.pattern.permute.xlu0 0
    %254 = vperm.xlu0 %253, %v236
    %v255 = vpop.permute.xlu0 %254
    %258 = vset.pattern.permute.xlu0 0
    %259 = vperm.xlu0 %258, %v237
    %v260 = vpop.permute.xlu0 %259
    %263 = vset.pattern.permute.xlu0 0
    %264 = vperm.xlu0 %263, %v238
    %v265 = vpop.permute.xlu0 %264
    %268 = vset.pattern.permute.xlu0 0
    %269 = vperm.xlu0 %268, %v239
    %v270 = vpop.permute.xlu0 %269
    %273 = vset.pattern.permute.xlu0 0
    %274 = vperm.xlu0 %273, %v240
    %v275 = vpop.permute.xlu0 %274
    %278 = vset.pattern.permute.xlu0 0
    %279 = vperm.xlu0 %278, %v241
    %v280 = vpop.permute.xlu0 %279
    %v282 = vmul.f32 %v170, %v245
    %v283 = vmul.f32 %v171, %v250
    %v284 = vmul.f32 %v172, %v255
    %v285 = vmul.f32 %v173, %v260
    %v286 = vmul.f32 %v174, %v265
    %v287 = vmul.f32 %v175, %v270
    %v288 = vmul.f32 %v176, %v275
    %v289 = vmul.f32 %v177, %v280
    %291 = vset.pattern.permute.xlu0 1
    %292 = vperm.xlu0 %291, %v210
    %v293 = vpop.permute.xlu0 %292
    %296 = vset.pattern.permute.xlu0 1
    %297 = vperm.xlu0 %296, %v211
    %v298 = vpop.permute.xlu0 %297
    %301 = vset.pattern.permute.xlu0 1
    %302 = vperm.xlu0 %301, %v212
    %v303 = vpop.permute.xlu0 %302
    %306 = vset.pattern.permute.xlu0 1
    %307 = vperm.xlu0 %306, %v213
    %v308 = vpop.permute.xlu0 %307
    %311 = vset.pattern.permute.xlu0 1
    %312 = vperm.xlu0 %311, %v214
    %v313 = vpop.permute.xlu0 %312
    %316 = vset.pattern.permute.xlu0 1
    %317 = vperm.xlu0 %316, %v215
    %v318 = vpop.permute.xlu0 %317
    %321 = vset.pattern.permute.xlu0 1
    %322 = vperm.xlu0 %321, %v216
    %v323 = vpop.permute.xlu0 %322
    %326 = vset.pattern.permute.xlu0 1
    %327 = vperm.xlu0 %326, %v217
    %v328 = vpop.permute.xlu0 %327
    %v330 = vadd.f32 %v282, %v293
    %v331 = vadd.f32 %v283, %v298
    %v332 = vadd.f32 %v284, %v303
    %v333 = vadd.f32 %v285, %v308
    %v334 = vadd.f32 %v286, %v313
    %v335 = vadd.f32 %v287, %v318
    %v336 = vadd.f32 %v288, %v323
    %v337 = vadd.f32 %v289, %v328
    %vm338 = vcmp.ge.f32.partialorder %v330, 0.0
    %vm339 = vcmp.ge.f32.partialorder %v331, 0.0
    %vm340 = vcmp.ge.f32.partialorder %v332, 0.0
    %vm341 = vcmp.ge.f32.partialorder %v333, 0.0
    %vm342 = vcmp.ge.f32.partialorder %v334, 0.0
    %vm343 = vcmp.ge.f32.partialorder %v335, 0.0
    %vm344 = vcmp.ge.f32.partialorder %v336, 0.0
    %vm345 = vcmp.ge.f32.partialorder %v337, 0.0
    %346 = vset.pattern.permute.xlu0 2
    %347 = vperm.xlu0 %346, %v210
    %v348 = vpop.permute.xlu0 %347
    %350 = vset.pattern.permute.xlu0 2
    %351 = vperm.xlu0 %350, %v211
    %v352 = vpop.permute.xlu0 %351
    %354 = vset.pattern.permute.xlu0 2
    %355 = vperm.xlu0 %354, %v212
    %v356 = vpop.permute.xlu0 %355
    %358 = vset.pattern.permute.xlu0 2
    %359 = vperm.xlu0 %358, %v213
    %v360 = vpop.permute.xlu0 %359
    %362 = vset.pattern.permute.xlu0 2
    %363 = vperm.xlu0 %362, %v214
    %v364 = vpop.permute.xlu0 %363
    %366 = vset.pattern.permute.xlu0 2
    %367 = vperm.xlu0 %366, %v215
    %v368 = vpop.permute.xlu0 %367
    %370 = vset.pattern.permute.xlu0 2
    %371 = vperm.xlu0 %370, %v216
    %v372 = vpop.permute.xlu0 %371
    %374 = vset.pattern.permute.xlu0 2
    %375 = vperm.xlu0 %374, %v217
    %v376 = vpop.permute.xlu0 %375
    %v378 = vmul.f32 %v330, %v348
    %v379 = vmul.f32 %v331, %v352
    %v380 = vmul.f32 %v332, %v356
    %v381 = vmul.f32 %v333, %v360
    %v382 = vmul.f32 %v334, %v364
    %v383 = vmul.f32 %v335, %v368
    %v384 = vmul.f32 %v336, %v372
    %v385 = vmul.f32 %v337, %v376
    %v386 = vsel %vm338, %v330, %v378
    %v387 = vsel %vm339, %v331, %v379
    %v388 = vsel %vm340, %v332, %v380
    %v389 = vsel %vm341, %v333, %v381
    %v390 = vsel %vm342, %v334, %v382
    %v391 = vsel %vm343, %v335, %v383
    %v392 = vsel %vm344, %v336, %v384
    %v393 = vsel %vm345, %v337, %v385
    %394 = vst [vmem:[#allocation2] sm:$0xff] %v386
    %395 = vst [vmem:[#allocation2 + $0x8] sm:$0xff] %v387
    %396 = vst [vmem:[#allocation2 + $0x10] sm:$0xff] %v388
    %397 = vst [vmem:[#allocation2 + $0x18] sm:$0xff] %v389
    %398 = vst [vmem:[#allocation2 + $0x20] sm:$0xff] %v390
    %399 = vst [vmem:[#allocation2 + $0x28] sm:$0xff] %v391
    %400 = vst [vmem:[#allocation2 + $0x30] sm:$0xff] %v392
    %401 = vst [vmem:[#allocation2 + $0x38] sm:$0xff] %v393
    // Predicated region
    $region14: #{tpu_custom_call.1} parent=1 // pred_check
      _
    $region15: #{tpu_custom_call.1} parent=1 // pred_check_branch
      %403 = sbr.rel (0) target = $region17
    $region16: #{tpu_custom_call.1} parent=1 // pred_region
      %s405 = ssub.s32 1024, 1024
      %406 = vsyncadd [#allocation3], %s405
      %s407 = sshll.u32 [#allocation2], 4
      %s408 = int_to_ptr.vmem [resolvable:$true] %s407
      %413 = dma.vmem_to_hbm [thread:$0]  %s408, 1024, %s3, [#allocation3], 128, 128, 8
    $region17: #{tpu_custom_call.1} parent=1 // pred_fallthru
      _
    // Predicated region
    $region18: #{tpu_custom_call.1} parent=1 // pred_check
      _
    $region19: #{tpu_custom_call.1} parent=1 // pred_check_branch
      %415 = sbr.rel (0) target = $region21
    $region20: #{tpu_custom_call.1} parent=1 // pred_region
      %416 = dma.done [#allocation3], 1024
    $region21: #{tpu_custom_call.1} parent=1 // pred_fallthru
      _
    %417 = vsyncpa [#allocation3], 1

</llo_original>
